<compile_context>
chip_gen: v6e
topology: v6e:2x2x1
jax: 0.10.0
libtpu: 0.0.40
codegen_flags: <defaults>
</compile_context>

<pallas_src>
import jax
import jax.numpy as jnp
from jax.experimental import pallas as pl
from jax.experimental.pallas import tpu as pltpu

EPS = 1e-5  # nn.BatchNorm2d default


# --------------------------- weight preparation ----------------------------- #
def _toeplitz_weights(w_oihw, W, dtype):
    """OIHW 3x3 weights -> one K-stacked block-Toeplitz slab (3*(W+2)*Cin, W*Cout).

    With the lane-folded input X[n, i, j*Cin + c] the conv becomes a single
    lane-dense MXU matmul per row block:
        Y[n, h, :] = concat_ky(X[n, h+ky, :]) @ concat_ky(B[ky])
    """
    Cout, Cin = w_oihw.shape[0], w_oihw.shape[1]
    wt = jnp.transpose(w_oihw, (2, 3, 1, 0)).astype(dtype)     # (ky, kx, Cin, Cout)
    rows = jnp.arange(W)[:, None]                               # w
    cols = rows + jnp.arange(3)[None, :]                        # j = w + kx
    slabs = []
    for ky in range(3):
        k = jnp.zeros((W, W + 2, Cin, Cout), dtype)
        k = k.at[rows, cols].set(
            jnp.broadcast_to(wt[ky][None], (W, 3, Cin, Cout)))
        # k[w, j, c, o] -> B[j*Cin + c, w*Cout + o]
        slabs.append(jnp.transpose(k, (1, 2, 0, 3)).reshape((W + 2) * Cin, W * Cout))
    return jnp.concatenate(slabs, axis=0)                       # (3*(W+2)*Cin, W*Cout)


# -------------------------------- kernels ----------------------------------- #
def _conv_rows(x_ref, w_ref):
    """Single fused MXU matmul for a batch block.

    x_ref: (Bt, H+2, (W+2)*Cin)  lane-folded zero-padded rows (f32)
    w_ref: (3*(W+2)*Cin, W*Cout) K-stacked block-Toeplitz slab (mm_dtype)
    returns (Bt*H, W*Cout) f32 conv output rows.
    """
    Bt, Hp2, Kin = x_ref.shape
    H = Hp2 - 2
    x = x_ref[...]
    # Overlapping row windows concatenated along the lane axis -> K = 3*Kin.
    lhs = jnp.concatenate([x[:, 0:H, :], x[:, 1:H + 1, :], x[:, 2:H + 2, :]],
                          axis=-1)                              # (Bt, H, 3*Kin)
    lhs = lhs.reshape(Bt * H, 3 * Kin).astype(w_ref.dtype)
    return jnp.dot(lhs, w_ref[...], preferred_element_type=jnp.float32)


def conv_stats_kernel(x_ref, w_ref, sum_ref, ssq_ref):
    """Stats-only pass: per-block partial BN sums over the conv output.

    sum_ref / ssq_ref: (1, 1, W*Cout) partial sum / sum-of-squares per lane.
    """
    acc = _conv_rows(x_ref, w_ref)                              # (Bt*H, lanes) f32
    sum_ref[...] = jnp.sum(acc, axis=0, keepdims=True)[None]
    ssq_ref[...] = jnp.sum(acc * acc, axis=0, keepdims=True)[None]


def conv_bn_prelu_kernel(x_ref, w_ref, scale_ref, shift_ref, alpha_ref, o_ref):
    """Fused conv recompute + BN-apply + PReLU (lane-dense output).

    scale_ref/shift_ref: (1, W*Cout) per-lane gamma*rsqrt(var+eps) / beta-mean*scale
    alpha_ref:           (1,) SMEM single-parameter PReLU slope
    o_ref:               (Bt, H, W*Cout)
    """
    Bt, H, lanes = o_ref.shape
    acc = _conv_rows(x_ref, w_ref)                              # (Bt*H, lanes) f32
    z = acc * scale_ref[...] + shift_ref[...]
    a = alpha_ref[0]
    z = jnp.where(z >= 0, z, a * z)                             # single vselect + vmul
    o_ref[...] = z.reshape(Bt, H, lanes).astype(o_ref.dtype)


# -------------------------------- wrapper ----------------------------------- #
def _pick_batch_tile(N, H, target_rows=256):
    """Largest divisor Bt of N with Bt*H <= target_rows (MXU M sizing)."""
    bt = 1
    for d in range(1, N + 1):
        if N % d == 0 and d * H <= target_rows:
            bt = d
    return bt


def conv_block(x_nchw, w_oihw, bias, gamma, beta, alpha, *, mm_dtype=jnp.bfloat16):
    """Conv2d(3x3, s1, p1) -> BatchNorm2d (training-mode batch stats) -> PReLU."""
    del bias  # exactly cancelled by training-mode BN mean subtraction
    N, Cin, H, W = x_nchw.shape
    Cout = w_oihw.shape[0]
    Kin = (W + 2) * Cin
    lanes = W * Cout

    # Lane-folded, zero-padded NHWC input: (N, H+2, (W+2)*Cin), kept f32 (MXU
    # operands are cast to mm_dtype after the in-kernel row-window concat).
    x = jnp.transpose(x_nchw, (0, 2, 3, 1))
    xpad = jnp.pad(x, ((0, 0), (1, 1), (1, 1), (0, 0)))
    xflat = xpad.reshape(N, H + 2, Kin).astype(jnp.float32)
    wb = _toeplitz_weights(w_oihw, W, mm_dtype)                 # (3*Kin, lanes)

    Bt = _pick_batch_tile(N, H)
    NB = N // Bt

    x_spec = pl.BlockSpec((Bt, H + 2, Kin), lambda n: (n, 0, 0))
    w_spec = pl.BlockSpec((3 * Kin, lanes), lambda n: (0, 0))   # constant index -> DMA'd once
    cparams = pltpu.CompilerParams(
        dimension_semantics=("parallel",),                      # no cross-step accumulation
        vmem_limit_bytes=32 * 1024 * 1024)                      # safe on v5e/v6e/v7x

    # ---- pass 1: conv -> per-block partial BN statistics (no conv writeback) ----
    psum, psq = pl.pallas_call(
        conv_stats_kernel,
        out_shape=(jax.ShapeDtypeStruct((NB, 1, lanes), jnp.float32),
                   jax.ShapeDtypeStruct((NB, 1, lanes), jnp.float32)),
        grid_spec=pltpu.PrefetchScalarGridSpec(
            num_scalar_prefetch=0,
            grid=(NB,),
            in_specs=[x_spec, w_spec],
            out_specs=(pl.BlockSpec((1, 1, lanes), lambda n: (n, 0, 0)),
                       pl.BlockSpec((1, 1, lanes), lambda n: (n, 0, 0))),
        ),
        compiler_params=cparams,
    )(xflat, wb)

    # tiny per-channel epilogue between the two kernels (Cout values)
    n_elems = N * H * W
    ch_sum = jnp.sum(psum, axis=(0, 1)).reshape(W, Cout).sum(axis=0)
    ch_ssq = jnp.sum(psq, axis=(0, 1)).reshape(W, Cout).sum(axis=0)
    mean = ch_sum / n_elems
    var = jnp.maximum(ch_ssq / n_elems - mean * mean, 0.0)      # biased; clamp >= 0
    scale_c = gamma * jax.lax.rsqrt(var + EPS)
    shift_c = beta - mean * scale_c
    scale = jnp.tile(scale_c, W).reshape(1, lanes)              # lane = w*Cout + o
    shift = jnp.tile(shift_c, W).reshape(1, lanes)

    # ---- pass 2: fused conv recompute + BN-apply + PReLU ----
    out_flat = pl.pallas_call(
        conv_bn_prelu_kernel,
        out_shape=jax.ShapeDtypeStruct((N, H, lanes), jnp.float32),
        grid_spec=pltpu.PrefetchScalarGridSpec(
            num_scalar_prefetch=0,
            grid=(NB,),
            in_specs=[x_spec, w_spec,
                      pl.BlockSpec((1, lanes), lambda n: (0, 0)),
                      pl.BlockSpec((1, lanes), lambda n: (0, 0)),
                      pl.BlockSpec(memory_space=pltpu.MemorySpace.SMEM)],
            out_specs=pl.BlockSpec((Bt, H, lanes), lambda n: (n, 0, 0)),
        ),
        compiler_params=cparams,
    )(xflat, wb, scale, shift, alpha.reshape(1))

    out = out_flat.reshape(N, H, W, Cout)
    return jnp.transpose(out, (0, 3, 1, 2))                     # back to NCHW (spec output)


# ------------------------------- reference ----------------------------------- #
def ref_forward(x, w, b, gamma, beta, alpha):
    y = jax.lax.conv_general_dilated(
        x, w, window_strides=(1, 1), padding=((1, 1), (1, 1)),
        dimension_numbers=('NCHW', 'OIHW', 'NCHW'))
    y = y + b[None, :, None, None]
    mean = jnp.mean(y, axis=(0, 2, 3), keepdims=True)
    var = jnp.mean((y - mean) ** 2, axis=(0, 2, 3), keepdims=True)
    yhat = (y - mean) / jnp.sqrt(var + EPS)
    z = yhat * gamma[None, :, None, None] + beta[None, :, None, None]
    return jnp.where(z >= 0, z, alpha * z)


if __name__ == "__main__":
    key = jax.random.PRNGKey(0)
    k1, k2, k3, k4, k5 = jax.random.split(key, 5)

    N, Cin, Cout, H, W = 2, 4, 8, 16, 16
    x = jax.random.normal(k1, (N, Cin, H, W), jnp.float32)

    # Deterministic synthetic parameters (shapes per nn.Conv2d / BatchNorm2d / PReLU).
    w = 0.1 * jax.random.normal(k2, (Cout, Cin, 3, 3), jnp.float32)
    b = 0.1 * jax.random.normal(k3, (Cout,), jnp.float32)
    gamma = 1.0 + 0.1 * jax.random.normal(k4, (Cout,), jnp.float32)
    beta = 0.1 * jax.random.normal(k5, (Cout,), jnp.float32)
    alpha = jnp.array([0.25], jnp.float32)   # PReLU default init, single parameter

    ref = ref_forward(x, w, b, gamma, beta, 0.25)
    conv_block_jit = jax.jit(conv_block, static_argnames=("mm_dtype",))

    # Default path: bf16 MXU operands with f32 accumulation.
    out = jax.block_until_ready(conv_block_jit(x, w, b, gamma, beta, alpha))
    assert out.shape == (N, Cout, H, W)
    assert jnp.allclose(out, ref, rtol=5e-2, atol=5e-2), "bf16 mismatch vs reference"

    # f32 MXU operands: must match the PyTorch forward tightly.
    out_f32 = jax.block_until_ready(
        conv_block_jit(x, w, b, gamma, beta, alpha, mm_dtype=jnp.float32))
    assert jnp.allclose(out_f32, ref, rtol=1e-4, atol=1e-4), "f32 mismatch vs reference"

    print("KERNEL_OK")
</pallas_src>

<mosaic_0001>
module attributes {stable_mosaic.version = 11 : i64} {
  func.func @conv_bn_prelu_kernel(%arg0: i32, %arg1: memref<2x18x72xf32, #tpu.memory_space<vmem>>, %arg2: memref<216x128xbf16, #tpu.memory_space<vmem>>, %arg3: memref<1x128xf32, #tpu.memory_space<vmem>>, %arg4: memref<1x128xf32, #tpu.memory_space<vmem>>, %arg5: memref<1xf32, #tpu.memory_space<smem>>, %arg6: memref<2x16x128xf32, #tpu.memory_space<vmem>>) attributes {dimension_semantics = [#tpu.dimension_semantics<parallel>], iteration_bounds = array<i64: 1>, scalar_prefetch = 0 : i64, scratch_operands = 0 : i64, tpu.core_type = #tpu.core_type<tc>, window_params = [{transform_indices = @transform_0, window_bounds = array<i64: 2, 18, 72>}, {pipeline_mode = #tpu.pipeline_mode<synchronous>, transform_indices = @transform_1, window_bounds = array<i64: 216, 128>}, {pipeline_mode = #tpu.pipeline_mode<synchronous>, transform_indices = @transform_2, window_bounds = array<i64: 1, 128>}, {pipeline_mode = #tpu.pipeline_mode<synchronous>, transform_indices = @transform_3, window_bounds = array<i64: 1, 128>}, {transform_indices = @transform_4, window_bounds = array<i64: 1>}, {transform_indices = @transform_5, window_bounds = array<i64: 2, 16, 128>}]} {
    %c0 = arith.constant 0 : index
    %c0_0 = arith.constant 0 : index
    %c0_1 = arith.constant 0 : index
    %0 = vector.load %arg1[%c0, %c0_0, %c0_1] : memref<2x18x72xf32, #tpu.memory_space<vmem>>, vector<2x18x72xf32>
    %1 = vector.extract_strided_slice %0 {offsets = [0, 0, 0], sizes = [2, 16, 72], strides = [1, 1, 1]} : vector<2x18x72xf32> to vector<2x16x72xf32>
    %2 = vector.extract_strided_slice %0 {offsets = [0, 1, 0], sizes = [2, 16, 72], strides = [1, 1, 1]} : vector<2x18x72xf32> to vector<2x16x72xf32>
    %3 = vector.extract_strided_slice %0 {offsets = [0, 2, 0], sizes = [2, 16, 72], strides = [1, 1, 1]} : vector<2x18x72xf32> to vector<2x16x72xf32>
    %4 = tpu.concatenate %1, %2, %3 in 2 : vector<2x16x72xf32>, vector<2x16x72xf32>, vector<2x16x72xf32> -> vector<2x16x216xf32>
    %5 = vector.shape_cast %4 : vector<2x16x216xf32> to vector<32x216xf32>
    %6 = arith.truncf %5 : vector<32x216xf32> to vector<32x216xbf16>
    %c0_2 = arith.constant 0 : index
    %c0_3 = arith.constant 0 : index
    %7 = vector.load %arg2[%c0_2, %c0_3] : memref<216x128xbf16, #tpu.memory_space<vmem>>, vector<216x128xbf16>
    %cst = arith.constant dense<0.000000e+00> : vector<32x128xf32>
    %8 = tpu.matmul %6, %7, %cst {dimension_numbers = #tpu.dot_dimension_numbers<[1], [0], [0], [1], [0, 0, 1, 1], [], []>} : vector<32x216xbf16>, vector<216x128xbf16>, vector<32x128xf32> -> vector<32x128xf32>
    %c0_4 = arith.constant 0 : index
    %c0_5 = arith.constant 0 : index
    %9 = vector.load %arg3[%c0_4, %c0_5] : memref<1x128xf32, #tpu.memory_space<vmem>>, vector<1x128xf32>
    %10 = vector.broadcast %9 : vector<1x128xf32> to vector<32x128xf32>
    %11 = arith.mulf %8, %10 : vector<32x128xf32>
    %c0_6 = arith.constant 0 : index
    %c0_7 = arith.constant 0 : index
    %12 = vector.load %arg4[%c0_6, %c0_7] : memref<1x128xf32, #tpu.memory_space<vmem>>, vector<1x128xf32>
    %13 = vector.broadcast %12 : vector<1x128xf32> to vector<32x128xf32>
    %14 = arith.addf %11, %13 : vector<32x128xf32>
    %c0_8 = arith.constant 0 : index
    %15 = memref.load %arg5[%c0_8] : memref<1xf32, #tpu.memory_space<smem>>
    %cst_9 = arith.constant 0.000000e+00 : f32
    %16 = vector.broadcast %cst_9 : f32 to vector<32x128xf32>
    %17 = arith.cmpf oge, %14, %16 : vector<32x128xf32>
    %18 = vector.broadcast %15 : f32 to vector<32x128xf32>
    %19 = arith.mulf %18, %14 : vector<32x128xf32>
    %20 = arith.select %17, %14, %19 : vector<32x128xi1>, vector<32x128xf32>
    %21 = vector.shape_cast %20 : vector<32x128xf32> to vector<2x16x128xf32>
    %c0_10 = arith.constant 0 : index
    %c0_11 = arith.constant 0 : index
    %c0_12 = arith.constant 0 : index
    %22 = vector.load %arg6[%c0_10, %c0_11, %c0_12] : memref<2x16x128xf32, #tpu.memory_space<vmem>>, vector<2x16x128xf32>
    tpu.vector_store %arg6[%c0_10, %c0_11, %c0_12], %21 {strides = array<i32>} : memref<2x16x128xf32, #tpu.memory_space<vmem>>, vector<2x16x128xf32>,
    return
  }
  func.func @transform_0(%arg0: i32) -> (i32, i32, i32) {
    %c0_i32 = arith.constant 0 : i32
    %c0_i32_0 = arith.constant 0 : i32
    %c0_i32_1 = arith.constant 0 : i32
    return %arg0, %c0_i32, %c0_i32_0 : i32, i32, i32
  }
  func.func @transform_1(%arg0: i32) -> (i32, i32) {
    %c0_i32 = arith.constant 0 : i32
    %c0_i32_0 = arith.constant 0 : i32
    %c0_i32_1 = arith.constant 0 : i32
    return %c0_i32, %c0_i32_0 : i32, i32
  }
  func.func @transform_2(%arg0: i32) -> (i32, i32) {
    %c0_i32 = arith.constant 0 : i32
    %c0_i32_0 = arith.constant 0 : i32
    %c0_i32_1 = arith.constant 0 : i32
    return %c0_i32, %c0_i32_0 : i32, i32
  }
  func.func @transform_3(%arg0: i32) -> (i32, i32) {
    %c0_i32 = arith.constant 0 : i32
    %c0_i32_0 = arith.constant 0 : i32
    %c0_i32_1 = arith.constant 0 : i32
    return %c0_i32, %c0_i32_0 : i32, i32
  }
  func.func @transform_4(%arg0: i32) -> i32 {
    %c0_i32 = arith.constant 0 : i32
    %c0_i32_0 = arith.constant 0 : i32
    return %c0_i32 : i32
  }
  func.func @transform_5(%arg0: i32) -> (i32, i32, i32) {
    %c0_i32 = arith.constant 0 : i32
    %c0_i32_0 = arith.constant 0 : i32
    %c0_i32_1 = arith.constant 0 : i32
    return %arg0, %c0_i32, %c0_i32_0 : i32, i32, i32
  }
}

module attributes {stable_mosaic.version = 11 : i64} {
  func.func @conv_stats_kernel(%arg0: i32, %arg1: memref<2x18x72xf32, #tpu.memory_space<vmem>>, %arg2: memref<216x128xbf16, #tpu.memory_space<vmem>>, %arg3: memref<1x1x128xf32, #tpu.memory_space<vmem>>, %arg4: memref<1x1x128xf32, #tpu.memory_space<vmem>>) attributes {dimension_semantics = [#tpu.dimension_semantics<parallel>], iteration_bounds = array<i64: 1>, scalar_prefetch = 0 : i64, scratch_operands = 0 : i64, tpu.core_type = #tpu.core_type<tc>, window_params = [{transform_indices = @transform_0, window_bounds = array<i64: 2, 18, 72>}, {pipeline_mode = #tpu.pipeline_mode<synchronous>, transform_indices = @transform_1, window_bounds = array<i64: 216, 128>}, {transform_indices = @transform_2, window_bounds = array<i64: 1, 1, 128>}, {transform_indices = @transform_3, window_bounds = array<i64: 1, 1, 128>}]} {
    %c0 = arith.constant 0 : index
    %c0_0 = arith.constant 0 : index
    %c0_1 = arith.constant 0 : index
    %0 = vector.load %arg1[%c0, %c0_0, %c0_1] : memref<2x18x72xf32, #tpu.memory_space<vmem>>, vector<2x18x72xf32>
    %1 = vector.extract_strided_slice %0 {offsets = [0, 0, 0], sizes = [2, 16, 72], strides = [1, 1, 1]} : vector<2x18x72xf32> to vector<2x16x72xf32>
    %2 = vector.extract_strided_slice %0 {offsets = [0, 1, 0], sizes = [2, 16, 72], strides = [1, 1, 1]} : vector<2x18x72xf32> to vector<2x16x72xf32>
    %3 = vector.extract_strided_slice %0 {offsets = [0, 2, 0], sizes = [2, 16, 72], strides = [1, 1, 1]} : vector<2x18x72xf32> to vector<2x16x72xf32>
    %4 = tpu.concatenate %1, %2, %3 in 2 : vector<2x16x72xf32>, vector<2x16x72xf32>, vector<2x16x72xf32> -> vector<2x16x216xf32>
    %5 = vector.shape_cast %4 : vector<2x16x216xf32> to vector<32x216xf32>
    %6 = arith.truncf %5 : vector<32x216xf32> to vector<32x216xbf16>
    %c0_2 = arith.constant 0 : index
    %c0_3 = arith.constant 0 : index
    %7 = vector.load %arg2[%c0_2, %c0_3] : memref<216x128xbf16, #tpu.memory_space<vmem>>, vector<216x128xbf16>
    %cst = arith.constant dense<0.000000e+00> : vector<32x128xf32>
    %8 = tpu.matmul %6, %7, %cst {dimension_numbers = #tpu.dot_dimension_numbers<[1], [0], [0], [1], [0, 0, 1, 1], [], []>} : vector<32x216xbf16>, vector<216x128xbf16>, vector<32x128xf32> -> vector<32x128xf32>
    %cst_4 = arith.constant dense<0.000000e+00> : vector<128xf32>
    %9 = vector.multi_reduction <add>, %8, %cst_4 [0] : vector<32x128xf32> to vector<128xf32>
    %10 = vector.shape_cast %9 : vector<128xf32> to vector<1x128xf32>
    %11 = vector.shape_cast %10 : vector<1x128xf32> to vector<1x1x128xf32>
    %c0_5 = arith.constant 0 : index
    %c0_6 = arith.constant 0 : index
    %c0_7 = arith.constant 0 : index
    %12 = vector.load %arg3[%c0_5, %c0_6, %c0_7] : memref<1x1x128xf32, #tpu.memory_space<vmem>>, vector<1x1x128xf32>
    tpu.vector_store %arg3[%c0_5, %c0_6, %c0_7], %11 {strides = array<i32>} : memref<1x1x128xf32, #tpu.memory_space<vmem>>, vector<1x1x128xf32>,
    %13 = arith.mulf %8, %8 : vector<32x128xf32>
    %cst_8 = arith.constant dense<0.000000e+00> : vector<128xf32>
    %14 = vector.multi_reduction <add>, %13, %cst_8 [0] : vector<32x128xf32> to vector<128xf32>
    %15 = vector.shape_cast %14 : vector<128xf32> to vector<1x128xf32>
    %16 = vector.shape_cast %15 : vector<1x128xf32> to vector<1x1x128xf32>
    %c0_9 = arith.constant 0 : index
    %c0_10 = arith.constant 0 : index
    %c0_11 = arith.constant 0 : index
    %17 = vector.load %arg4[%c0_9, %c0_10, %c0_11] : memref<1x1x128xf32, #tpu.memory_space<vmem>>, vector<1x1x128xf32>
    tpu.vector_store %arg4[%c0_9, %c0_10, %c0_11], %16 {strides = array<i32>} : memref<1x1x128xf32, #tpu.memory_space<vmem>>, vector<1x1x128xf32>,
    return
  }
  func.func @transform_0(%arg0: i32) -> (i32, i32, i32) {
    %c0_i32 = arith.constant 0 : i32
    %c0_i32_0 = arith.constant 0 : i32
    %c0_i32_1 = arith.constant 0 : i32
    return %arg0, %c0_i32, %c0_i32_0 : i32, i32, i32
  }
  func.func @transform_1(%arg0: i32) -> (i32, i32) {
    %c0_i32 = arith.constant 0 : i32
    %c0_i32_0 = arith.constant 0 : i32
    %c0_i32_1 = arith.constant 0 : i32
    return %c0_i32, %c0_i32_0 : i32, i32
  }
  func.func @transform_2(%arg0: i32) -> (i32, i32, i32) {
    %c0_i32 = arith.constant 0 : i32
    %c0_i32_0 = arith.constant 0 : i32
    %c0_i32_1 = arith.constant 0 : i32
    return %arg0, %c0_i32, %c0_i32_0 : i32, i32, i32
  }
  func.func @transform_3(%arg0: i32) -> (i32, i32, i32) {
    %c0_i32 = arith.constant 0 : i32
    %c0_i32_0 = arith.constant 0 : i32
    %c0_i32_1 = arith.constant 0 : i32
    return %arg0, %c0_i32, %c0_i32_0 : i32, i32, i32
  }
}

</mosaic_0001>

<llo_original>
// kernel: tile.13
$region0: #{tile.13}
  #allocation0 [shape = 's32[1]{0}', space=sflag, size = 0x4, scoped, tag = 'scoped memory for tile.13']
  %s0 = inlined_call_operand.vmem [shape: f32[8], index: 0, kind: input, shape index: {}]
  %s1 = inlined_call_operand.vmem [shape: f32[16,8], index: 1, kind: output, shape index: {}]
  // Predicated region
  $region2: #{tile.13} parent=0 // pred_check
    _
  $region3: #{tile.13} parent=0 // pred_check_branch
    %3 = sbr.rel (0) target = $region5
  $region4: #{tile.13} parent=0 // pred_region
    _
  $region5: #{tile.13} parent=0 // pred_fallthru
    _
  %v4 = vld [vmem:[%s0] ss:$0 sm:$0xff]
  %5 = vst [vmem:[%s1] sm:$0xff] %v4
  %s6 = scalar_lea.vmem %s1, 8
  %7 = vst [vmem:[%s6] sm:$0xff] %v4

// kernel: tile.14
$region0: #{tile.14}
  %s0 = inlined_call_operand.vmem [shape: f32[16,8], index: 0, kind: input, shape index: {}]
  %s1 = inlined_call_operand.vmem [shape: f32[1,128], index: 1, kind: output, shape index: {}]
  $region1: #{tile.14} parent=0
    #allocation0 [shape = 'u8[4096]{0}', space=vmem, size = 0x1000, scoped, tag = 'scoped mem for output reshape']
    %v2 = vld [vmem:[%s0] sm:$0x1]
    %vm3 = vcmask 64512
    %4 = vst.msk [vmem:[#allocation0] sm:$0x1] %vm3, %v2
    %s5 = scalar_lea.vmem %s0, 15
    %v6 = vld [vmem:[%s5] sm:$0x1]
    %7 = vrot.lane.b32.xlu0 %v6, 120
    %v8 = vpop.permute.xlu0 %7
    %vm9 = vcmask 1048512
    %10 = vst.msk [vmem:[#allocation0] sm:$0x1] %vm9, %v8
    %s11 = scalar_lea.vmem %s0, 14
    %v12 = vld [vmem:[%s11] sm:$0x1]
    %13 = vrot.lane.b32.xlu0 %v12, 112
    %v14 = vpop.permute.xlu0 %13
    %vm15 = vcmask 982912
    %16 = vst.msk [vmem:[#allocation0] sm:$0x1] %vm15, %v14
    %s17 = scalar_lea.vmem %s0, 13
    %v18 = vld [vmem:[%s17] sm:$0x1]
    %19 = vrot.lane.b32.xlu0 %v18, 104
    %v20 = vpop.permute.xlu0 %19
    %vm21 = vcmask 917312
    %22 = vst.msk [vmem:[#allocation0] sm:$0x1] %vm21, %v20
    %s23 = scalar_lea.vmem %s0, 12
    %v24 = vld [vmem:[%s23] sm:$0x1]
    %25 = vrot.lane.b32.xlu0 %v24, 96
    %v26 = vpop.permute.xlu0 %25
    %vm27 = vcmask 851712
    %28 = vst.msk [vmem:[#allocation0] sm:$0x1] %vm27, %v26
    %s29 = scalar_lea.vmem %s0, 11
    %v30 = vld [vmem:[%s29] sm:$0x1]
    %31 = vrot.lane.b32.xlu0 %v30, 88
    %v32 = vpop.permute.xlu0 %31
    %vm33 = vcmask 786112
    %34 = vst.msk [vmem:[#allocation0] sm:$0x1] %vm33, %v32
    %s35 = scalar_lea.vmem %s0, 10
    %v36 = vld [vmem:[%s35] sm:$0x1]
    %37 = vrot.lane.b32.xlu0 %v36, 80
    %v38 = vpop.permute.xlu0 %37
    %vm39 = vcmask 720512
    %40 = vst.msk [vmem:[#allocation0] sm:$0x1] %vm39, %v38
    %s41 = scalar_lea.vmem %s0, 9
    %v42 = vld [vmem:[%s41] sm:$0x1]
    %43 = vrot.lane.b32.xlu0 %v42, 72
    %v44 = vpop.permute.xlu0 %43
    %vm45 = vcmask 654912
    %46 = vst.msk [vmem:[#allocation0] sm:$0x1] %vm45, %v44
    %s47 = scalar_lea.vmem %s0, 8
    %v48 = vld [vmem:[%s47] sm:$0x1]
    %49 = vrot.lane.b32.xlu0 %v48, 64
    %v50 = vpop.permute.xlu0 %49
    %vm51 = vcmask 589312
    %52 = vst.msk [vmem:[#allocation0] sm:$0x1] %vm51, %v50
    %s53 = scalar_lea.vmem %s0, 7
    %v54 = vld [vmem:[%s53] sm:$0x1]
    %55 = vrot.lane.b32.xlu0 %v54, 56
    %v56 = vpop.permute.xlu0 %55
    %vm57 = vcmask 523712
    %58 = vst.msk [vmem:[#allocation0] sm:$0x1] %vm57, %v56
    %s59 = scalar_lea.vmem %s0, 6
    %v60 = vld [vmem:[%s59] sm:$0x1]
    %61 = vrot.lane.b32.xlu0 %v60, 48
    %v62 = vpop.permute.xlu0 %61
    %vm63 = vcmask 458112
    %64 = vst.msk [vmem:[#allocation0] sm:$0x1] %vm63, %v62
    %s65 = scalar_lea.vmem %s0, 5
    %v66 = vld [vmem:[%s65] sm:$0x1]
    %67 = vrot.lane.b32.xlu0 %v66, 40
    %v68 = vpop.permute.xlu0 %67
    %vm69 = vcmask 392512
    %70 = vst.msk [vmem:[#allocation0] sm:$0x1] %vm69, %v68
    %s71 = scalar_lea.vmem %s0, 4
    %v72 = vld [vmem:[%s71] sm:$0x1]
    %73 = vrot.lane.b32.xlu0 %v72, 32
    %v74 = vpop.permute.xlu0 %73
    %vm75 = vcmask 326912
    %76 = vst.msk [vmem:[#allocation0] sm:$0x1] %vm75, %v74
    %s77 = scalar_lea.vmem %s0, 3
    %v78 = vld [vmem:[%s77] sm:$0x1]
    %79 = vrot.lane.b32.xlu0 %v78, 24
    %v80 = vpop.permute.xlu0 %79
    %vm81 = vcmask 261312
    %82 = vst.msk [vmem:[#allocation0] sm:$0x1] %vm81, %v80
    %s83 = scalar_lea.vmem %s0, 2
    %v84 = vld [vmem:[%s83] sm:$0x1]
    %85 = vrot.lane.b32.xlu0 %v84, 16
    %v86 = vpop.permute.xlu0 %85
    %vm87 = vcmask 195712
    %88 = vst.msk [vmem:[#allocation0] sm:$0x1] %vm87, %v86
    %s89 = scalar_lea.vmem %s0, 1
    %v90 = vld [vmem:[%s89] sm:$0x1]
    %91 = vrot.lane.b32.xlu0 %v90, 8
    %v92 = vpop.permute.xlu0 %91
    %vm93 = vcmask 130112
    %94 = vst.msk [vmem:[#allocation0] sm:$0x1] %vm93, %v92
    %s96 = sshll.u32 1, 1
    %s97 = ssub.s32 %s96, 1
    %v99 = vld [vmem:[#allocation0] sm:%s97]
    %s100 = sshll.u32 1, 1
    %s101 = ssub.s32 %s100, 1
    %102 = vst [vmem:[%s1] sm:%s101] %v99

// kernel: conv_block.2
$region0: #{conv_block.2}
  #allocation0 [shape = 'u32[]', space=smem, size = 0x4, offset = 0x4, fixed_abs, tag = 'smem constant byte address 0x4 - core index']
  #allocation1 [shape = 'u32[144,128]{1,0:T(1,128)}', space=vmem, size = 0x12000, scoped, tag = 'internal scratch']
  %s0 = inlined_call_operand.vmem [shape: f32[2,18,72], index: 0, kind: input, shape index: {}]
  %s1 = inlined_call_operand.vmem [shape: bf16[216,128], index: 1, kind: input, shape index: {}]
  %s2 = inlined_call_operand.vmem [shape: f32[1,1,128], index: 2, kind: output, shape index: {0}]
  %s3 = inlined_call_operand.vmem [shape: f32[1,1,128], index: 3, kind: output, shape index: {1}]
  %4 = xla_tuple %s2, %s3
  %s5 = sld [smem:[#allocation0]]
  $region26: #{conv_block.2} parent=0
    _
  %s7 = ssub.s32 1, %s5
  %s8 = scalar_select 0, %s7, %s5
  // Predicated region
  $region2: #{conv_block.2} parent=0 // pred_check
    _
  $region3: #{conv_block.2} parent=0 // pred_check_branch
    %10 = sbr.rel (0) target = $region5
  $region4: #{conv_block.2} parent=0 // pred_region
    _
  $region5: #{conv_block.2} parent=0 // pred_fallthru
    _
  // Predicated region
  $region6: #{conv_block.2} parent=0 // pred_check
    _
  $region7: #{conv_block.2} parent=0 // pred_check_branch
    %12 = sbr.rel (0) target = $region9
  $region8: #{conv_block.2} parent=0 // pred_region
    _
  $region9: #{conv_block.2} parent=0 // pred_fallthru
    _
  %v14 = vld [vmem:[%s0] sm:$0xff]
  %v15 = vld [vmem:[%s0 + $0x8] sm:$0xff]
  %v16 = vld [vmem:[%s0 + $0x10] sm:$0x3]
  %v17 = vld [vmem:[%s0 + $0x18] sm:$0xff]
  %v18 = vld [vmem:[%s0 + $0x20] sm:$0xff]
  %v19 = vld [vmem:[%s0 + $0x28] sm:$0x3]
  %vm26 = vcmask 1046528
  %v27 = vrot.slane %v14, 1
  %v28 = vrot.slane %v15, 1
  %v29 = vsel %vm26, %v27, %v28
  %v30 = vrot.slane %v16, 1
  %v31 = vsel %vm26, %v28, %v30
  %v32 = vrot.slane %v17, 1
  %v33 = vrot.slane %v18, 1
  %v34 = vsel %vm26, %v32, %v33
  %v35 = vrot.slane %v19, 1
  %v36 = vsel %vm26, %v33, %v35
  %37 = vrot.lane.b32.xlu0 %v29, 72
  %v38 = vpop.permute.xlu0 %37
  %39 = vrot.lane.b32.xlu0 %v31, 72
  %v40 = vpop.permute.xlu0 %39
  %41 = vrot.lane.b32.xlu0 %v34, 72
  %v42 = vpop.permute.xlu0 %41
  %43 = vrot.lane.b32.xlu0 %v36, 72
  %v44 = vpop.permute.xlu0 %43
  %vm49 = vcmask 1045504
  %v50 = vrot.slane %v14, 2
  %v51 = vrot.slane %v15, 2
  %v52 = vsel %vm49, %v50, %v51
  %v53 = vrot.slane %v16, 2
  %v54 = vsel %vm49, %v51, %v53
  %v55 = vrot.slane %v17, 2
  %v56 = vrot.slane %v18, 2
  %v57 = vsel %vm49, %v55, %v56
  %v58 = vrot.slane %v19, 2
  %v59 = vsel %vm49, %v56, %v58
  %60 = vrot.lane.b32.xlu0 %v52, 16
  %v61 = vpop.permute.xlu0 %60
  %62 = vrot.lane.b32.xlu0 %v54, 16
  %v63 = vpop.permute.xlu0 %62
  %64 = vrot.lane.b32.xlu0 %v57, 16
  %v65 = vpop.permute.xlu0 %64
  %66 = vrot.lane.b32.xlu0 %v59, 16
  %v67 = vpop.permute.xlu0 %66
  %vm72 = vcmask 588800
  %v73 = vsel %vm72, %v14, %v38
  %v74 = vsel %vm72, %v15, %v40
  %v75 = vsel %vm72, %v17, %v42
  %v76 = vsel %vm72, %v18, %v44
  %vm77 = vcmask 130048
  %v78 = vsel %vm77, %v38, %v61
  %v79 = vsel %vm77, %v40, %v63
  %v80 = vsel %vm77, %v42, %v65
  %v81 = vsel %vm77, %v44, %v67
  %v82 = vpack.c.bf16 %v74, %v73
  %v83 = vpack.c.bf16 %v79, %v78
  %v84 = vpack.c.bf16 %v76, %v75
  %v85 = vpack.c.bf16 %v81, %v80
  %v86 = vld [vmem:[%s1] sm:$0xf]
  %v87 = vld [vmem:[%s1 + $0x4] sm:$0xf]
  %v88 = vld [vmem:[%s1 + $0x8] sm:$0xf]
  %v89 = vld [vmem:[%s1 + $0xc] sm:$0xf]
  %v90 = vld [vmem:[%s1 + $0x10] sm:$0xf]
  %v91 = vld [vmem:[%s1 + $0x14] sm:$0xf]
  %v92 = vld [vmem:[%s1 + $0x18] sm:$0xf]
  %v93 = vld [vmem:[%s1 + $0x1c] sm:$0xf]
  %v94 = vld [vmem:[%s1 + $0x20] sm:$0xf]
  %v95 = vld [vmem:[%s1 + $0x24] sm:$0xf]
  %v96 = vld [vmem:[%s1 + $0x28] sm:$0xf]
  %v97 = vld [vmem:[%s1 + $0x2c] sm:$0xf]
  %v98 = vld [vmem:[%s1 + $0x30] sm:$0xf]
  %v99 = vld [vmem:[%s1 + $0x34] sm:$0xf]
  %v100 = vld [vmem:[%s1 + $0x38] sm:$0xf]
  %v101 = vld [vmem:[%s1 + $0x3c] sm:$0xf]
  %v102 = vld [vmem:[%s1 + $0x40] sm:$0xf]
  %v103 = vld [vmem:[%s1 + $0x44] sm:$0xf]
  %v104 = vld [vmem:[%s1 + $0x48] sm:$0xf]
  %v105 = vld [vmem:[%s1 + $0x4c] sm:$0xf]
  %v106 = vld [vmem:[%s1 + $0x50] sm:$0xf]
  %v107 = vld [vmem:[%s1 + $0x54] sm:$0xf]
  %v108 = vld [vmem:[%s1 + $0x58] sm:$0xf]
  %v109 = vld [vmem:[%s1 + $0x5c] sm:$0xf]
  %v110 = vld [vmem:[%s1 + $0x60] sm:$0xf]
  %v111 = vld [vmem:[%s1 + $0x64] sm:$0xf]
  %v112 = vld [vmem:[%s1 + $0x68] sm:$0xf]
  %v140 = vunpack.c.l.b16 %v86
  %v141 = vunpack.c.l.b16 %v87
  %v142 = vunpack.c.l.b16 %v88
  %v143 = vunpack.c.l.b16 %v89
  %v144 = vunpack.c.l.b16 %v90
  %v145 = vunpack.c.l.b16 %v91
  %v146 = vunpack.c.l.b16 %v92
  %v147 = vunpack.c.l.b16 %v93
  %v148 = vunpack.c.l.b16 %v94
  %v149 = vunpack.c.l.b16 %v95
  %v150 = vunpack.c.l.b16 %v96
  %v151 = vunpack.c.l.b16 %v97
  %v152 = vunpack.c.l.b16 %v98
  %v153 = vunpack.c.l.b16 %v99
  %v154 = vunpack.c.l.b16 %v100
  %v155 = vunpack.c.l.b16 %v101
  %v156 = vunpack.c.l.b16 %v102
  %v157 = vunpack.c.l.b16 %v103
  %v158 = vunpack.c.l.b16 %v104
  %v159 = vunpack.c.l.b16 %v105
  %v160 = vunpack.c.l.b16 %v106
  %v161 = vunpack.c.l.b16 %v107
  %v162 = vunpack.c.l.b16 %v108
  %v163 = vunpack.c.l.b16 %v109
  %v164 = vunpack.c.l.b16 %v110
  %v165 = vunpack.c.l.b16 %v111
  %v166 = vunpack.c.l.b16 %v112
  %v167 = vpack.c.b16 %v141, %v140
  %v168 = vpack.c.b16 %v143, %v142
  %v169 = vpack.c.b16 %v145, %v144
  %v170 = vpack.c.b16 %v147, %v146
  %v171 = vpack.c.b16 %v149, %v148
  %v172 = vpack.c.b16 %v151, %v150
  %v173 = vpack.c.b16 %v153, %v152
  %v174 = vpack.c.b16 %v155, %v154
  %v175 = vpack.c.b16 %v157, %v156
  %v176 = vpack.c.b16 %v159, %v158
  %v177 = vpack.c.b16 %v161, %v160
  %v178 = vpack.c.b16 %v163, %v162
  %v179 = vpack.c.b16 %v165, %v164
  %v180 = vpack.c.b16 %v166, %v166
  %vm194 = vcmask 719872
  %v196 = vsel %vm194, %v83, 0
  %v199 = vsel %vm194, %v85, 0
  %vm201 = vcmask 1043456
  %v203 = vsel %vm201, %v180, 0
  %205 = vmatprep.subr.bf16.mxu0 0
  %206 = vmatpush1.bf16.msra.mxu0 %v174
  %207 = vmatprep.subr.bf16.mxu0 0
  %208 = vmatpush1.bf16.msra.mxu0 %v173
  %209 = vmatprep.subr.bf16.mxu0 0
  %210 = vmatpush1.bf16.msra.mxu0 %v172
  %211 = vmatprep.subr.bf16.mxu0 0
  %212 = vmatpush1.bf16.msra.mxu0 %v171
  %213 = vmatprep.subr.bf16.mxu0 0
  %214 = vmatpush1.bf16.msra.mxu0 %v170
  %215 = vmatprep.subr.bf16.mxu0 0
  %216 = vmatpush1.bf16.msra.mxu0 %v169
  %217 = vmatprep.subr.bf16.mxu0 0
  %218 = vmatpush1.bf16.msra.mxu0 %v168
  %219 = vmatprep.subr.bf16.mxu0 0
  %220 = vmatpush1.bf16.msra.mxu0 %v167
  %221 = vmatprep.subr.bf16.mxu0 0
  %222 = vmatpush2.bf16.msra.mxu0 0
  %223 = vmatprep.subr.bf16.mxu0 0
  %224 = vmatpush2.bf16.msra.mxu0 0
  %225 = vmatprep.subr.bf16.mxu0 0
  %226 = vmatpush2.bf16.msra.mxu0 %v203
  %227 = vmatprep.subr.bf16.mxu0 0
  %228 = vmatpush2.bf16.msra.mxu0 %v179
  %229 = vmatprep.subr.bf16.mxu0 0
  %230 = vmatpush2.bf16.msra.mxu0 %v178
  %231 = vmatprep.subr.bf16.mxu0 0
  %232 = vmatpush2.bf16.msra.mxu0 %v177
  %233 = vmatprep.subr.bf16.mxu0 0
  %234 = vmatpush2.bf16.msra.mxu0 %v176
  %235 = vmatprep.subr.bf16.mxu0 0
  %236 = vmatpush2.bf16.msra.mxu0 %v175
  %237 = vmatprep.mubr.bf16.mxu0 %v196
  %238 = vmatmul.mubr.bf16.gmra.mxu0 %v82
  %v239 = vpop.f32.mrf.mxu0
  %v240 = vadd.f32 0.0, %v239
  %v241 = vpop.f32.mrf.mxu0
  %v242 = vpop.f32.mrf.mxu0
  %v243 = vadd.f32 0.0, %v242
  %v244 = vpop.f32.mrf.mxu0
  %245 = vmatprep.mubr.bf16.mxu0 %v199
  %246 = vmatmul.mubr.bf16.gmra.mxu0 %v84
  %v247 = vpop.f32.mrf.mxu0
  %v248 = vadd.f32 0.0, %v247
  %v249 = vpop.f32.mrf.mxu0
  %v250 = vpop.f32.mrf.mxu0
  %v251 = vadd.f32 0.0, %v250
  %v252 = vpop.f32.mrf.mxu0
  %253 = vdwg.mxu0
  %v254 = vadd.f32 %v240, %v243
  %v255 = vadd.f32 %v254, %v248
  %v256 = vadd.f32 %v255, %v251
  %v257 = vrot.slane %v256, 4
  %v258 = vadd.f32 %v256, %v257
  %v259 = vrot.slane %v258, 2
  %v260 = vadd.f32 %v258, %v259
  %v261 = vrot.slane %v260, 1
  %v262 = vadd.f32 %v260, %v261
  %263 = vst [vmem:[%s2] sm:$0x1] %v262
  %v264 = vmul.f32 %v240, %v240
  %v265 = vmul.f32 %v243, %v243
  %v266 = vmul.f32 %v248, %v248
  %v267 = vmul.f32 %v251, %v251
  %v268 = vadd.f32 %v264, %v265
  %v269 = vadd.f32 %v268, %v266
  %v270 = vadd.f32 %v269, %v267
  %v271 = vrot.slane %v270, 4
  %v272 = vadd.f32 %v270, %v271
  %v273 = vrot.slane %v272, 2
  %v274 = vadd.f32 %v272, %v273
  %v275 = vrot.slane %v274, 1
  %v276 = vadd.f32 %v274, %v275
  %277 = vst [vmem:[%s3] sm:$0x1] %v276
  // Predicated region
  $region10: #{conv_block.2} parent=0 // pred_check
    _
  $region11: #{conv_block.2} parent=0 // pred_check_branch
    %279 = sbr.rel (0) target = $region13
  $region12: #{conv_block.2} parent=0 // pred_region
    _
  $region13: #{conv_block.2} parent=0 // pred_fallthru
    _
  // Predicated region
  $region14: #{conv_block.2} parent=0 // pred_check
    _
  $region15: #{conv_block.2} parent=0 // pred_check_branch
    %281 = sbr.rel (0) target = $region17
  $region16: #{conv_block.2} parent=0 // pred_region
    _
  $region17: #{conv_block.2} parent=0 // pred_fallthru
    _
  // Predicated region
  $region18: #{conv_block.2} parent=0 // pred_check
    _
  $region19: #{conv_block.2} parent=0 // pred_check_branch
    %283 = sbr.rel (0) target = $region21
  $region20: #{conv_block.2} parent=0 // pred_region
    _
  $region21: #{conv_block.2} parent=0 // pred_fallthru
    _
  // Predicated region
  $region22: #{conv_block.2} parent=0 // pred_check
    _
  $region23: #{conv_block.2} parent=0 // pred_check_branch
    %285 = sbr.rel (0) target = $region25
  $region24: #{conv_block.2} parent=0 // pred_region
    _
  $region25: #{conv_block.2} parent=0 // pred_fallthru
    _

// kernel: conv_block.3
$region0: #{conv_block.3}
  #allocation0 [shape = 'u32[]', space=smem, size = 0x4, offset = 0x4, fixed_abs, tag = 'smem constant byte address 0x4 - core index']
  #allocation1 [shape = 'u32[144,128]{1,0:T(1,128)}', space=vmem, size = 0x12000, scoped, tag = 'internal scratch']
  #allocation2 [shape = 'f32[1]{0:T(128)S(6)}', space=smem, size = 0x200, scoped, tag = 'scoped memory for conv_block.3']
  %s0 = inlined_call_operand.vmem [shape: f32[2,18,72], index: 0, kind: input, shape index: {}]
  %s1 = inlined_call_operand.vmem [shape: bf16[216,128], index: 1, kind: input, shape index: {}]
  %s2 = inlined_call_operand.vmem [shape: f32[1,128], index: 2, kind: input, shape index: {}]
  %s3 = inlined_call_operand.vmem [shape: f32[1,128], index: 3, kind: input, shape index: {}]
  %s4 = inlined_call_operand.<no memory space> [shape: f32[1], index: 4, kind: input, shape index: {}]
  %s5 = inlined_call_operand.vmem [shape: f32[2,16,128], index: 5, kind: output, shape index: {}]
  %s6 = sld [smem:[#allocation0]]
  $region30: #{conv_block.3} parent=0
    _
  %s8 = ssub.s32 1, %s6
  %s9 = scalar_select 0, %s8, %s6
  %10 = sst [smem:[#allocation2]] %s4
  // Predicated region
  $region2: #{conv_block.3} parent=0 // pred_check
    _
  $region3: #{conv_block.3} parent=0 // pred_check_branch
    %12 = sbr.rel (0) target = $region5
  $region4: #{conv_block.3} parent=0 // pred_region
    _
  $region5: #{conv_block.3} parent=0 // pred_fallthru
    _
  // Predicated region
  $region6: #{conv_block.3} parent=0 // pred_check
    _
  $region7: #{conv_block.3} parent=0 // pred_check_branch
    %14 = sbr.rel (0) target = $region9
  $region8: #{conv_block.3} parent=0 // pred_region
    _
  $region9: #{conv_block.3} parent=0 // pred_fallthru
    _
  // Predicated region
  $region10: #{conv_block.3} parent=0 // pred_check
    _
  $region11: #{conv_block.3} parent=0 // pred_check_branch
    %16 = sbr.rel (0) target = $region13
  $region12: #{conv_block.3} parent=0 // pred_region
    _
  $region13: #{conv_block.3} parent=0 // pred_fallthru
    _
  // Predicated region
  $region14: #{conv_block.3} parent=0 // pred_check
    _
  $region15: #{conv_block.3} parent=0 // pred_check_branch
    %18 = sbr.rel (0) target = $region17
  $region16: #{conv_block.3} parent=0 // pred_region
    _
  $region17: #{conv_block.3} parent=0 // pred_fallthru
    _
  // Predicated region
  $region18: #{conv_block.3} parent=0 // pred_check
    _
  $region19: #{conv_block.3} parent=0 // pred_check_branch
    %20 = sbr.rel (0) target = $region21
  $region20: #{conv_block.3} parent=0 // pred_region
    _
  $region21: #{conv_block.3} parent=0 // pred_fallthru
    _
  %v22 = vld [vmem:[%s0] sm:$0xff]
  %v23 = vld [vmem:[%s0 + $0x8] sm:$0xff]
  %v24 = vld [vmem:[%s0 + $0x10] sm:$0x3]
  %v25 = vld [vmem:[%s0 + $0x18] sm:$0xff]
  %v26 = vld [vmem:[%s0 + $0x20] sm:$0xff]
  %v27 = vld [vmem:[%s0 + $0x28] sm:$0x3]
  %vm34 = vcmask 1046528
  %v35 = vrot.slane %v22, 1
  %v36 = vrot.slane %v23, 1
  %v37 = vsel %vm34, %v35, %v36
  %v38 = vrot.slane %v24, 1
  %v39 = vsel %vm34, %v36, %v38
  %v40 = vrot.slane %v25, 1
  %v41 = vrot.slane %v26, 1
  %v42 = vsel %vm34, %v40, %v41
  %v43 = vrot.slane %v27, 1
  %v44 = vsel %vm34, %v41, %v43
  %45 = vrot.lane.b32.xlu0 %v37, 72
  %v46 = vpop.permute.xlu0 %45
  %47 = vrot.lane.b32.xlu0 %v39, 72
  %v48 = vpop.permute.xlu0 %47
  %49 = vrot.lane.b32.xlu0 %v42, 72
  %v50 = vpop.permute.xlu0 %49
  %51 = vrot.lane.b32.xlu0 %v44, 72
  %v52 = vpop.permute.xlu0 %51
  %vm57 = vcmask 1045504
  %v58 = vrot.slane %v22, 2
  %v59 = vrot.slane %v23, 2
  %v60 = vsel %vm57, %v58, %v59
  %v61 = vrot.slane %v24, 2
  %v62 = vsel %vm57, %v59, %v61
  %v63 = vrot.slane %v25, 2
  %v64 = vrot.slane %v26, 2
  %v65 = vsel %vm57, %v63, %v64
  %v66 = vrot.slane %v27, 2
  %v67 = vsel %vm57, %v64, %v66
  %68 = vrot.lane.b32.xlu0 %v60, 16
  %v69 = vpop.permute.xlu0 %68
  %70 = vrot.lane.b32.xlu0 %v62, 16
  %v71 = vpop.permute.xlu0 %70
  %72 = vrot.lane.b32.xlu0 %v65, 16
  %v73 = vpop.permute.xlu0 %72
  %74 = vrot.lane.b32.xlu0 %v67, 16
  %v75 = vpop.permute.xlu0 %74
  %vm80 = vcmask 588800
  %v81 = vsel %vm80, %v22, %v46
  %v82 = vsel %vm80, %v23, %v48
  %v83 = vsel %vm80, %v25, %v50
  %v84 = vsel %vm80, %v26, %v52
  %vm85 = vcmask 130048
  %v86 = vsel %vm85, %v46, %v69
  %v87 = vsel %vm85, %v48, %v71
  %v88 = vsel %vm85, %v50, %v73
  %v89 = vsel %vm85, %v52, %v75
  %v90 = vpack.c.bf16 %v82, %v81
  %v91 = vpack.c.bf16 %v87, %v86
  %v92 = vpack.c.bf16 %v84, %v83
  %v93 = vpack.c.bf16 %v89, %v88
  %v94 = vld [vmem:[%s1] sm:$0xf]
  %v95 = vld [vmem:[%s1 + $0x4] sm:$0xf]
  %v96 = vld [vmem:[%s1 + $0x8] sm:$0xf]
  %v97 = vld [vmem:[%s1 + $0xc] sm:$0xf]
  %v98 = vld [vmem:[%s1 + $0x10] sm:$0xf]
  %v99 = vld [vmem:[%s1 + $0x14] sm:$0xf]
  %v100 = vld [vmem:[%s1 + $0x18] sm:$0xf]
  %v101 = vld [vmem:[%s1 + $0x1c] sm:$0xf]
  %v102 = vld [vmem:[%s1 + $0x20] sm:$0xf]
  %v103 = vld [vmem:[%s1 + $0x24] sm:$0xf]
  %v104 = vld [vmem:[%s1 + $0x28] sm:$0xf]
  %v105 = vld [vmem:[%s1 + $0x2c] sm:$0xf]
  %v106 = vld [vmem:[%s1 + $0x30] sm:$0xf]
  %v107 = vld [vmem:[%s1 + $0x34] sm:$0xf]
  %v108 = vld [vmem:[%s1 + $0x38] sm:$0xf]
  %v109 = vld [vmem:[%s1 + $0x3c] sm:$0xf]
  %v110 = vld [vmem:[%s1 + $0x40] sm:$0xf]
  %v111 = vld [vmem:[%s1 + $0x44] sm:$0xf]
  %v112 = vld [vmem:[%s1 + $0x48] sm:$0xf]
  %v113 = vld [vmem:[%s1 + $0x4c] sm:$0xf]
  %v114 = vld [vmem:[%s1 + $0x50] sm:$0xf]
  %v115 = vld [vmem:[%s1 + $0x54] sm:$0xf]
  %v116 = vld [vmem:[%s1 + $0x58] sm:$0xf]
  %v117 = vld [vmem:[%s1 + $0x5c] sm:$0xf]
  %v118 = vld [vmem:[%s1 + $0x60] sm:$0xf]
  %v119 = vld [vmem:[%s1 + $0x64] sm:$0xf]
  %v120 = vld [vmem:[%s1 + $0x68] sm:$0xf]
  %v148 = vunpack.c.l.b16 %v94
  %v149 = vunpack.c.l.b16 %v95
  %v150 = vunpack.c.l.b16 %v96
  %v151 = vunpack.c.l.b16 %v97
  %v152 = vunpack.c.l.b16 %v98
  %v153 = vunpack.c.l.b16 %v99
  %v154 = vunpack.c.l.b16 %v100
  %v155 = vunpack.c.l.b16 %v101
  %v156 = vunpack.c.l.b16 %v102
  %v157 = vunpack.c.l.b16 %v103
  %v158 = vunpack.c.l.b16 %v104
  %v159 = vunpack.c.l.b16 %v105
  %v160 = vunpack.c.l.b16 %v106
  %v161 = vunpack.c.l.b16 %v107
  %v162 = vunpack.c.l.b16 %v108
  %v163 = vunpack.c.l.b16 %v109
  %v164 = vunpack.c.l.b16 %v110
  %v165 = vunpack.c.l.b16 %v111
  %v166 = vunpack.c.l.b16 %v112
  %v167 = vunpack.c.l.b16 %v113
  %v168 = vunpack.c.l.b16 %v114
  %v169 = vunpack.c.l.b16 %v115
  %v170 = vunpack.c.l.b16 %v116
  %v171 = vunpack.c.l.b16 %v117
  %v172 = vunpack.c.l.b16 %v118
  %v173 = vunpack.c.l.b16 %v119
  %v174 = vunpack.c.l.b16 %v120
  %v175 = vpack.c.b16 %v149, %v148
  %v176 = vpack.c.b16 %v151, %v150
  %v177 = vpack.c.b16 %v153, %v152
  %v178 = vpack.c.b16 %v155, %v154
  %v179 = vpack.c.b16 %v157, %v156
  %v180 = vpack.c.b16 %v159, %v158
  %v181 = vpack.c.b16 %v161, %v160
  %v182 = vpack.c.b16 %v163, %v162
  %v183 = vpack.c.b16 %v165, %v164
  %v184 = vpack.c.b16 %v167, %v166
  %v185 = vpack.c.b16 %v169, %v168
  %v186 = vpack.c.b16 %v171, %v170
  %v187 = vpack.c.b16 %v173, %v172
  %v188 = vpack.c.b16 %v174, %v174
  %vm202 = vcmask 719872
  %v204 = vsel %vm202, %v91, 0
  %v207 = vsel %vm202, %v93, 0
  %vm209 = vcmask 1043456
  %v211 = vsel %vm209, %v188, 0
  %213 = vmatprep.subr.bf16.mxu0 0
  %214 = vmatpush1.bf16.msra.mxu0 %v182
  %215 = vmatprep.subr.bf16.mxu0 0
  %216 = vmatpush1.bf16.msra.mxu0 %v181
  %217 = vmatprep.subr.bf16.mxu0 0
  %218 = vmatpush1.bf16.msra.mxu0 %v180
  %219 = vmatprep.subr.bf16.mxu0 0
  %220 = vmatpush1.bf16.msra.mxu0 %v179
  %221 = vmatprep.subr.bf16.mxu0 0
  %222 = vmatpush1.bf16.msra.mxu0 %v178
  %223 = vmatprep.subr.bf16.mxu0 0
  %224 = vmatpush1.bf16.msra.mxu0 %v177
  %225 = vmatprep.subr.bf16.mxu0 0
  %226 = vmatpush1.bf16.msra.mxu0 %v176
  %227 = vmatprep.subr.bf16.mxu0 0
  %228 = vmatpush1.bf16.msra.mxu0 %v175
  %229 = vmatprep.subr.bf16.mxu0 0
  %230 = vmatpush2.bf16.msra.mxu0 0
  %231 = vmatprep.subr.bf16.mxu0 0
  %232 = vmatpush2.bf16.msra.mxu0 0
  %233 = vmatprep.subr.bf16.mxu0 0
  %234 = vmatpush2.bf16.msra.mxu0 %v211
  %235 = vmatprep.subr.bf16.mxu0 0
  %236 = vmatpush2.bf16.msra.mxu0 %v187
  %237 = vmatprep.subr.bf16.mxu0 0
  %238 = vmatpush2.bf16.msra.mxu0 %v186
  %239 = vmatprep.subr.bf16.mxu0 0
  %240 = vmatpush2.bf16.msra.mxu0 %v185
  %241 = vmatprep.subr.bf16.mxu0 0
  %242 = vmatpush2.bf16.msra.mxu0 %v184
  %243 = vmatprep.subr.bf16.mxu0 0
  %244 = vmatpush2.bf16.msra.mxu0 %v183
  %245 = vmatprep.mubr.bf16.mxu0 %v204
  %246 = vmatmul.mubr.bf16.gmra.mxu0 %v90
  %v247 = vpop.f32.mrf.mxu0
  %v248 = vadd.f32 0.0, %v247
  %v249 = vpop.f32.mrf.mxu0
  %v250 = vpop.f32.mrf.mxu0
  %v251 = vadd.f32 0.0, %v250
  %v252 = vpop.f32.mrf.mxu0
  %253 = vmatprep.mubr.bf16.mxu0 %v207
  %254 = vmatmul.mubr.bf16.gmra.mxu0 %v92
  %v255 = vpop.f32.mrf.mxu0
  %v256 = vadd.f32 0.0, %v255
  %v257 = vpop.f32.mrf.mxu0
  %v258 = vpop.f32.mrf.mxu0
  %v259 = vadd.f32 0.0, %v258
  %v260 = vpop.f32.mrf.mxu0
  %261 = vdwg.mxu0
  %v262 = vld [vmem:[%s2] sm:$0x1]
  %v264 = vlaneseq
  %v265 = vshrl.u32 %v264, 7
  %v266 = vsub.s32 0, %v265
  %v267 = vrot.slane %v262, %v266
  %v269 = vmul.f32 %v248, %v267
  %v270 = vmul.f32 %v251, %v267
  %v271 = vmul.f32 %v256, %v267
  %v272 = vmul.f32 %v259, %v267
  %v273 = vld [vmem:[%s3] sm:$0x1]
  %v275 = vlaneseq
  %v276 = vshrl.u32 %v275, 7
  %v277 = vsub.s32 0, %v276
  %v278 = vrot.slane %v273, %v277
  %v280 = vadd.f32 %v269, %v278
  %v281 = vadd.f32 %v270, %v278
  %v282 = vadd.f32 %v271, %v278
  %v283 = vadd.f32 %v272, %v278
  %s284 = sld [smem:[#allocation2]]
  %vm285 = vcmp.ge.f32.partialorder %v280, 0.0
  %vm286 = vcmp.ge.f32.partialorder %v281, 0.0
  %vm287 = vcmp.ge.f32.partialorder %v282, 0.0
  %vm288 = vcmp.ge.f32.partialorder %v283, 0.0
  %v289 = vstv %s284
  %v290 = vmul.f32 %v289, %v280
  %v291 = vmul.f32 %v289, %v281
  %v292 = vmul.f32 %v289, %v282
  %v293 = vmul.f32 %v289, %v283
  %v294 = vsel %vm285, %v280, %v290
  %v295 = vsel %vm286, %v281, %v291
  %v296 = vsel %vm287, %v282, %v292
  %v297 = vsel %vm288, %v283, %v293
  %298 = vst [vmem:[%s5] sm:$0xff] %v294
  %299 = vst [vmem:[%s5 + $0x8] sm:$0xff] %v295
  %300 = vst [vmem:[%s5 + $0x10] sm:$0xff] %v296
  %301 = vst [vmem:[%s5 + $0x18] sm:$0xff] %v297
  // Predicated region
  $region22: #{conv_block.3} parent=0 // pred_check
    _
  $region23: #{conv_block.3} parent=0 // pred_check_branch
    %303 = sbr.rel (0) target = $region25
  $region24: #{conv_block.3} parent=0 // pred_region
    _
  $region25: #{conv_block.3} parent=0 // pred_fallthru
    _
  // Predicated region
  $region26: #{conv_block.3} parent=0 // pred_check
    _
  $region27: #{conv_block.3} parent=0 // pred_check_branch
    %305 = sbr.rel (0) target = $region29
  $region28: #{conv_block.3} parent=0 // pred_region
    _
  $region29: #{conv_block.3} parent=0 // pred_fallthru
    _

</llo_original>
